<compile_context>
chip_gen: v7x
topology: tpu7x:2x2x1
jax: 0.10.0
libtpu: 0.0.40
codegen_flags: <defaults>
</compile_context>

<pallas_src>
import functools

import jax
import jax.numpy as jnp
from jax.experimental import pallas as pl
from jax.experimental.pallas import tpu as pltpu


def _rodt_gather_kernel(perm_ref, x_ref, o_ref, *, groups: int):
    """Gather rows of the flattened table into a lane-dense output slab.

    perm_ref : (RT, g) int32 -- slab row r, lane group j takes x[perm[r, j], :]
    x_ref    : (1, N, E)     -- full row table for this batch element
                                (VMEM-resident across the row-tile grid axis)
    o_ref    : (1, RT, g*E)  -- lane-dense output slab tile
    """
    x = x_ref[0]                       # (N, E)
    n = x.shape[0]
    rt = o_ref.shape[1]

    # One-hot built in-kernel from the (tiny) index block: iota vs. index.
    col_ids = jax.lax.broadcasted_iota(jnp.int32, (rt, n), 1)

    pieces = []
    for j in range(groups):
        sel = perm_ref[:, j:j + 1]                        # (RT, 1) int32
        onehot = (col_ids == sel).astype(x.dtype)         # (RT, N) exact 0/1
        pieces.append(
            jnp.dot(onehot, x, preferred_element_type=jnp.float32)
        )                                                 # (RT, E) f32
    slab = pieces[0] if groups == 1 else jnp.concatenate(pieces, axis=-1)
    o_ref[0] = slab.astype(o_ref.dtype)


def _round_up(x: int, m: int) -> int:
    return (x + m - 1) // m * m


def _pick_lane_groups(d: int, embed_dim: int) -> int:
    """Smallest divisor g of d such that g*E is 128-lane aligned (else 1)."""
    if embed_dim % 128 == 0:
        return 1
    for g in range(1, d + 1):
        if d % g == 0 and (g * embed_dim) % 128 == 0:
            return g
    # TODO(synk): no divisor of d makes the output slab 128-lane aligned;
    # writeback falls back to embed_dim-wide masked stores.
    return 1


def _pick_rows_per_tile(total_rows: int, batch: int, max_rows: int = 512) -> int:
    """Slab rows per grid step: multiple of 8, as large as reasonable."""
    best = None
    for t in range(8, min(total_rows, max_rows) + 1, 8):
        if total_rows % t == 0:
            best = t
    if best is None:
        # No nice divisor: take the whole thing if small, else a fixed tile
        # (the wrapper pads the ragged tail).
        best = total_rows if total_rows <= max_rows else max_rows
    # v7x has 2 TensorCores per chip: keep >= 2 programs on a parallel axis
    # when there is only one batch element.
    if batch == 1 and best >= total_rows and total_rows >= 16:
        for t in range(8, total_rows // 2 + 1, 8):
            if total_rows % t == 0:
                best = t
    return best


def rodt_construction(
    M: jax.Array,
    permutator: jax.Array,
    d: int,
    *,
    use_pallas: bool | None = None,
    max_rows_per_tile: int = 512,
) -> jax.Array:
    """JAX/Pallas equivalent of rODTConstruction.forward.

    M          : (b, n_cond, n_col, embed_dim)
    permutator : (n_cond * n_col,) integer permutation indices
    d          : group size of the final reshape
    """
    b, n_cond, n_col, embed_dim = M.shape
    N = n_cond * n_col
    assert N % d == 0, "n_cond * n_col must be divisible by d (PyTorch reshape)"
    x = M.reshape(b, N, embed_dim)
    permutator = permutator.astype(jnp.int32)
    itemsize = jnp.dtype(M.dtype).itemsize

    if use_pallas is None:
        # Tiny problems: launch + ~0.35us/step overhead dominates; let XLA gather.
        use_pallas = b * N * embed_dim * itemsize >= (1 << 20)
    if not use_pallas:
        return x[:, permutator, :].reshape(b, -1, d, embed_dim)

    g = _pick_lane_groups(d, embed_dim)           # lane groups per output row
    nr = N // g                                   # slab rows (lane-dense view)
    rt = _pick_rows_per_tile(nr, b, max_rows_per_tile)
    n_tiles = -(-nr // rt)
    nr_pad = n_tiles * rt

    # Index table arranged as (slab_row, lane_group); pad ragged rows with a
    # valid index (0) and slice the padded output away afterwards.
    perm_slab = permutator.reshape(nr, g)
    if nr_pad != nr:
        perm_slab = jnp.pad(perm_slab, ((0, nr_pad - nr), (0, 0)))

    # --- VMEM budget from the real padded block footprint -------------------
    x_blk = _round_up(N, 8) * _round_up(embed_dim, 128) * itemsize
    o_blk = _round_up(rt, 8) * _round_up(g * embed_dim, 128) * itemsize
    p_blk = _round_up(rt, 8) * 128 * 4
    onehot_tmp = _round_up(rt, 8) * _round_up(N, 128) * 4     # in-kernel f32 temps
    footprint = 2 * (x_blk + o_blk + p_blk) + 2 * onehot_tmp  # double-buffered
    try:
        vmem_cap = int(pltpu.get_tpu_info().vmem_capacity_bytes)
    except Exception:  # conservative default: v7x has 64 MiB per TC
        vmem_cap = 64 * 1024 * 1024
    vmem_limit = int(min(max(2 * footprint, 32 * 1024 * 1024),
                         int(0.9 * vmem_cap)))

    grid_spec = pltpu.PrefetchScalarGridSpec(
        num_scalar_prefetch=0,
        grid=(b, n_tiles),
        in_specs=[
            # Tiny int32 index tile for the current output-row tile.
            pl.BlockSpec((rt, g), lambda bi, ri: (ri, 0)),
            # Full flattened row table; constant in ri -> stays VMEM-resident.
            pl.BlockSpec((1, N, embed_dim), lambda bi, ri: (bi, 0, 0)),
        ],
        out_specs=pl.BlockSpec((1, rt, g * embed_dim), lambda bi, ri: (bi, ri, 0)),
    )

    cost = pl.CostEstimate(
        flops=int(2 * b * nr_pad * g * N * embed_dim),
        transcendentals=0,
        bytes_accessed=int((b * N * embed_dim + b * nr_pad * g * embed_dim)
                           * itemsize + nr_pad * g * 4),
    )

    out_slab = pl.pallas_call(
        functools.partial(_rodt_gather_kernel, groups=g),
        out_shape=jax.ShapeDtypeStruct((b, nr_pad, g * embed_dim), M.dtype),
        grid_spec=grid_spec,
        compiler_params=pltpu.CompilerParams(
            dimension_semantics=("parallel", "parallel"),
            vmem_limit_bytes=vmem_limit,
        ),
        cost_estimate=cost,
    )(perm_slab, x)

    if nr_pad != nr:
        out_slab = out_slab[:, :nr, :]
    # (b, N//g, g*E) has the same contiguous bytes as (b, N//d, d, E):
    # this reshape is a free view, matching the PyTorch output layout.
    return out_slab.reshape(b, -1, d, embed_dim)


if __name__ == "__main__":
    # Module hyper-parameters (small, consistent with the forward pass).
    n_cond, n_col, d = 4, 4, 4
    b, embed_dim = 2, 32
    N = n_cond * n_col

    key = jax.random.PRNGKey(0)
    k_perm, k_m = jax.random.split(key)

    # Deterministic analogue of torch.rand(n_cond*n_col).argsort(-1).
    permutator = jnp.argsort(jax.random.uniform(k_perm, (N,))).astype(jnp.int32)

    # Values rounded to bf16-representable f32 so the 0/1 MXU "copy" is exact
    # under any f32 matmul pass configuration -> the check below is tight.
    M = jax.random.normal(k_m, (b, n_cond, n_col, embed_dim), dtype=jnp.float32)
    M = M.astype(jnp.bfloat16).astype(jnp.float32)

    # The demo problem is ~KB-sized (below the auto-fallback threshold), so
    # force the Pallas path to actually exercise the kernel.
    out = rodt_construction(M, permutator, d, use_pallas=True)
    out = jax.block_until_ready(out)

    # Pure-JAX reference of the PyTorch forward.
    ref = M.reshape(b, -1, embed_dim)[:, permutator, :].reshape(b, -1, d, embed_dim)

    assert out.shape == (b, N // d, d, embed_dim), out.shape
    assert out.dtype == M.dtype
    assert jnp.allclose(out, ref, rtol=0.0, atol=1e-6), "mismatch vs reference"
    print("KERNEL_OK")
</pallas_src>

<mosaic_0001>
module attributes {stable_mosaic.version = 11 : i64} {
  func.func @_rodt_gather_kernel(%arg0: i32, %arg1: i32, %arg2: memref<4x4xi32, #tpu.memory_space<vmem>>, %arg3: memref<1x16x32xf32, #tpu.memory_space<vmem>>, %arg4: memref<1x4x128xf32, #tpu.memory_space<vmem>>) attributes {dimension_semantics = [#tpu.dimension_semantics<parallel>, #tpu.dimension_semantics<parallel>], iteration_bounds = array<i64: 2, 1>, scalar_prefetch = 0 : i64, scratch_operands = 0 : i64, tpu.core_type = #tpu.core_type<tc>, window_params = [{transform_indices = @transform_0, window_bounds = array<i64: 4, 4>}, {transform_indices = @transform_1, window_bounds = array<i64: 1, 16, 32>}, {transform_indices = @transform_2, window_bounds = array<i64: 1, 4, 128>}]} {
    %c0 = arith.constant 0 : index
    %c0_0 = arith.constant 0 : index
    %c0_1 = arith.constant 0 : index
    %0 = vector.load %arg3[%c0, %c0_0, %c0_1] : memref<1x16x32xf32, #tpu.memory_space<vmem>>, vector<1x16x32xf32>
    %1 = vector.shape_cast %0 : vector<1x16x32xf32> to vector<16x32xf32>
    %2 = tpu.iota {dimensions = array<i32: 1>} : vector<4x16xi32>
    %c0_2 = arith.constant 0 : index
    %c0_3 = arith.constant 0 : index
    %3 = vector.load %arg2[%c0_2, %c0_3] : memref<4x4xi32, #tpu.memory_space<vmem>>, vector<4x1xi32>
    %4 = vector.broadcast %3 : vector<4x1xi32> to vector<4x16xi32>
    %5 = arith.cmpi eq, %2, %4 : vector<4x16xi32>
    %6 = arith.extui %5 : vector<4x16xi1> to vector<4x16xi32>
    %7 = arith.sitofp %6 : vector<4x16xi32> to vector<4x16xf32>
    %cst = arith.constant dense<0.000000e+00> : vector<4x32xf32>
    %8 = tpu.matmul %7, %1, %cst {dimension_numbers = #tpu.dot_dimension_numbers<[1], [0], [0], [1], [0, 0, 1, 1], [], []>} : vector<4x16xf32>, vector<16x32xf32>, vector<4x32xf32> -> vector<4x32xf32>
    %c0_4 = arith.constant 0 : index
    %c1 = arith.constant 1 : index
    %9 = vector.load %arg2[%c0_4, %c1] : memref<4x4xi32, #tpu.memory_space<vmem>>, vector<4x1xi32>
    %10 = vector.broadcast %9 : vector<4x1xi32> to vector<4x16xi32>
    %11 = arith.cmpi eq, %2, %10 : vector<4x16xi32>
    %12 = arith.extui %11 : vector<4x16xi1> to vector<4x16xi32>
    %13 = arith.sitofp %12 : vector<4x16xi32> to vector<4x16xf32>
    %cst_5 = arith.constant dense<0.000000e+00> : vector<4x32xf32>
    %14 = tpu.matmul %13, %1, %cst_5 {dimension_numbers = #tpu.dot_dimension_numbers<[1], [0], [0], [1], [0, 0, 1, 1], [], []>} : vector<4x16xf32>, vector<16x32xf32>, vector<4x32xf32> -> vector<4x32xf32>
    %c0_6 = arith.constant 0 : index
    %c2 = arith.constant 2 : index
    %15 = vector.load %arg2[%c0_6, %c2] : memref<4x4xi32, #tpu.memory_space<vmem>>, vector<4x1xi32>
    %16 = vector.broadcast %15 : vector<4x1xi32> to vector<4x16xi32>
    %17 = arith.cmpi eq, %2, %16 : vector<4x16xi32>
    %18 = arith.extui %17 : vector<4x16xi1> to vector<4x16xi32>
    %19 = arith.sitofp %18 : vector<4x16xi32> to vector<4x16xf32>
    %cst_7 = arith.constant dense<0.000000e+00> : vector<4x32xf32>
    %20 = tpu.matmul %19, %1, %cst_7 {dimension_numbers = #tpu.dot_dimension_numbers<[1], [0], [0], [1], [0, 0, 1, 1], [], []>} : vector<4x16xf32>, vector<16x32xf32>, vector<4x32xf32> -> vector<4x32xf32>
    %c0_8 = arith.constant 0 : index
    %c3 = arith.constant 3 : index
    %21 = vector.load %arg2[%c0_8, %c3] : memref<4x4xi32, #tpu.memory_space<vmem>>, vector<4x1xi32>
    %22 = vector.broadcast %21 : vector<4x1xi32> to vector<4x16xi32>
    %23 = arith.cmpi eq, %2, %22 : vector<4x16xi32>
    %24 = arith.extui %23 : vector<4x16xi1> to vector<4x16xi32>
    %25 = arith.sitofp %24 : vector<4x16xi32> to vector<4x16xf32>
    %cst_9 = arith.constant dense<0.000000e+00> : vector<4x32xf32>
    %26 = tpu.matmul %25, %1, %cst_9 {dimension_numbers = #tpu.dot_dimension_numbers<[1], [0], [0], [1], [0, 0, 1, 1], [], []>} : vector<4x16xf32>, vector<16x32xf32>, vector<4x32xf32> -> vector<4x32xf32>
    %27 = tpu.concatenate %8, %14, %20, %26 in 1 : vector<4x32xf32>, vector<4x32xf32>, vector<4x32xf32>, vector<4x32xf32> -> vector<4x128xf32>
    %c0_10 = arith.constant 0 : index
    %c0_11 = arith.constant 0 : index
    %c0_12 = arith.constant 0 : index
    %28 = vector.load %arg4[%c0_10, %c0_11, %c0_12] : memref<1x4x128xf32, #tpu.memory_space<vmem>>, vector<1x4x128xf32>
    %29 = vector.shape_cast %28 : vector<1x4x128xf32> to vector<4x128xf32>
    %30 = vector.shape_cast %27 : vector<4x128xf32> to vector<1x4x128xf32>
    tpu.vector_store %arg4[%c0_10, %c0_11, %c0_12], %30 {strides = array<i32>} : memref<1x4x128xf32, #tpu.memory_space<vmem>>, vector<1x4x128xf32>,
    return
  }
  func.func @transform_0(%arg0: i32, %arg1: i32) -> (i32, i32) {
    %c0_i32 = arith.constant 0 : i32
    %c0_i32_0 = arith.constant 0 : i32
    return %arg1, %c0_i32 : i32, i32
  }
  func.func @transform_1(%arg0: i32, %arg1: i32) -> (i32, i32, i32) {
    %c0_i32 = arith.constant 0 : i32
    %c0_i32_0 = arith.constant 0 : i32
    %c0_i32_1 = arith.constant 0 : i32
    return %arg0, %c0_i32, %c0_i32_0 : i32, i32, i32
  }
  func.func @transform_2(%arg0: i32, %arg1: i32) -> (i32, i32, i32) {
    %c0_i32 = arith.constant 0 : i32
    %c0_i32_0 = arith.constant 0 : i32
    return %arg0, %arg1, %c0_i32 : i32, i32, i32
  }
}

</mosaic_0001>

<llo_original>
// kernel: tpu_custom_call.1
$region0: #{tpu_custom_call.1}
  #allocation0 [shape = 'u32[]', space=smem, size = 0x4, offset = 0x4, fixed_abs, tag = 'smem constant byte address 0x4 - core index']
  #allocation1 [shape = 'u32[144,128]{1,0:T(1,128)}', space=vmem, size = 0x12000, scoped, tag = 'internal scratch']
  %s0 = inlined_call_operand.hbm [shape: s32[4,4], index: 0, kind: input, shape index: {}]
  %s1 = inlined_call_operand.hbm [shape: f32[2,16,32], index: 1, kind: input, shape index: {}]
  %s2 = inlined_call_operand.hbm [shape: f32[2,4,128], index: 2, kind: output, shape index: {}]
  %s3 = sld [smem:[#allocation0]]
  $region49: #{tpu_custom_call.1} parent=0
    _
  %s5 = ssub.s32 1, %s3
  %s6 = scalar_select 0, %s5, %s3
  $region1: #{tpu_custom_call.1} parent=0
    #allocation2 [shape = 'u8[2048]{0}', space=vmem, size = 0x800, scoped, tag = 'input window, operand 0, single buffered']
    #allocation3 [shape = 's32[2]{0}', space=sflag, size = 0x8, scoped, tag = 'scoped memory for tpu_custom_call.1']
    #allocation4 [shape = 's32[2]{0}', space=sflag, size = 0x8, scoped, tag = 'scoped memory for tpu_custom_call.1']
    #allocation5 [shape = 'u8[16384]{0}', space=vmem, size = 0x4000, scoped, tag = 'input window, operand 1']
    #allocation6 [shape = 's32[2]{0}', space=sflag, size = 0x8, scoped, tag = 'scoped memory for tpu_custom_call.1']
    #allocation7 [shape = 'u8[4096]{0}', space=vmem, size = 0x1000, scoped, tag = 'output window, operand 0']
    %7 = vsyncpa [#allocation3], 0
    %8 = vsyncpa [#allocation6], 0
    %s9 = scalar_lea.sflag [#allocation6], 1
    %10 = vsyncpa %s9, 0
    %11 = vsyncpa [#allocation4], 0
    %s12 = scalar_lea.sflag [#allocation4], 1
    %13 = vsyncpa %s12, 0
    loop: start=0, step=1, limit=4
    $region2: #{tpu_custom_call.1} parent=1 // loop_pre_header
      _
    $region3: #{tpu_custom_call.1} parent=1 // loop_header
      %s15 = sphi 0, %s19
      %p16 = scmp.ge.s32.totalorder %s15, 4
      %s22 = sphi 0, %s34
      %s23 = sphi 0, %s30
      %s24 = sphi 0, %s22
      %s25 = sphi 0, %s23
      %s26 = sphi 0, %s24
      %s27 = sphi 0, %s25
      %s37 = sphi 0, %s39
      %s40 = sphi 0, %s37
      %s41 = sphi 0, %s40
      %s57 = sphi 0, %s41
      %s63 = sphi 0, %s65
      %s66 = sphi 0, %s63
      %s67 = sphi 0, %s66
      %s83 = sphi 0, %s67
      %s91 = sphi 0, %s93
      %s94 = sphi 0, %s91
      %s95 = sphi 0, %s94
      %s111 = sphi 0, %s95
    $region4: #{tpu_custom_call.1} parent=1 // loop_header_branch
      %18 = sbr.rel (%p16) target = $region8
    $region5: #{tpu_custom_call.1} parent=1 // loop_body
      %s20 = ssub.s32 %s15, 1
      %s21 = ssub.s32 %s15, 2
      %s28 = sadd.s32 1, %s23
      %p29 = scmp.ge.s32.totalorder %s28, 1
      %s30 = scalar_select %p29, 0, %s28
      %s31 = sadd.s32 1, %s22
      %s32 = scalar_select %p29, %s31, %s22
      %p33 = scmp.ge.s32.totalorder %s32, 2
      %s34 = scalar_select %p33, 0, %s32
      %s35 = ssub.s32 %s23, %s30
      %p36 = scmp.eq.s32.totalorder %s35, 0
      %s38 = sadd.s32 %s37, 1
      %s39 = scalar_select %p36, %s37, %s38
      %p42 = pneg %p36
      %p43 = scmp.eq.s32.totalorder %s15, 1
      %p44 = por %p42, %p43
      %p45 = scmp.ne.s32.totalorder %s37, %s40
      %p46 = scmp.eq.s32.totalorder %s15, 0
      %p47 = por %p45, %p46
      %p48 = scmp.ne.s32.totalorder %s37, %s40
      %p49 = scmp.eq.s32.totalorder %s20, 1
      %p50 = por %p48, %p49
      %p51 = scmp.ne.s32.totalorder %s40, %s41
      %p52 = scmp.eq.s32.totalorder %s20, 0
      %p53 = por %p51, %p52
      %p54 = scmp.ne.s32.totalorder %s40, %s41
      %p55 = scmp.eq.s32.totalorder %s21, 1
      %p56 = por %p54, %p55
      %p58 = scmp.ne.s32.totalorder %s41, %s57
      %p59 = scmp.eq.s32.totalorder %s21, 0
      %p60 = por %p58, %p59
      %s61 = ssub.s32 %s22, %s34
      %p62 = scmp.eq.s32.totalorder %s61, 0
      %s64 = sadd.s32 %s63, 1
      %s65 = scalar_select %p62, %s63, %s64
      %p68 = pneg %p62
      %p69 = scmp.eq.s32.totalorder %s15, 1
      %p70 = por %p68, %p69
      %p71 = scmp.ne.s32.totalorder %s63, %s66
      %p72 = scmp.eq.s32.totalorder %s15, 0
      %p73 = por %p71, %p72
      %p74 = scmp.ne.s32.totalorder %s63, %s66
      %p75 = scmp.eq.s32.totalorder %s20, 1
      %p76 = por %p74, %p75
      %p77 = scmp.ne.s32.totalorder %s66, %s67
      %p78 = scmp.eq.s32.totalorder %s20, 0
      %p79 = por %p77, %p78
      %p80 = scmp.ne.s32.totalorder %s66, %s67
      %p81 = scmp.eq.s32.totalorder %s21, 1
      %p82 = por %p80, %p81
      %p84 = scmp.ne.s32.totalorder %s67, %s83
      %p85 = scmp.eq.s32.totalorder %s21, 0
      %p86 = por %p84, %p85
      %s87 = ssub.s32 %s22, %s34
      %s88 = ssub.s32 %s23, %s30
      %s89 = sor.u32 %s87, %s88
      %p90 = scmp.eq.s32.totalorder %s89, 0
      %s92 = sadd.s32 %s91, 1
      %s93 = scalar_select %p90, %s91, %s92
      %p96 = pneg %p90
      %p97 = scmp.eq.s32.totalorder %s15, 1
      %p98 = por %p96, %p97
      %p99 = scmp.ne.s32.totalorder %s91, %s94
      %p100 = scmp.eq.s32.totalorder %s15, 0
      %p101 = por %p99, %p100
      %p102 = scmp.ne.s32.totalorder %s91, %s94
      %p103 = scmp.eq.s32.totalorder %s20, 1
      %p104 = por %p102, %p103
      %p105 = scmp.ne.s32.totalorder %s94, %s95
      %p106 = scmp.eq.s32.totalorder %s20, 0
      %p107 = por %p105, %p106
      %p108 = scmp.ne.s32.totalorder %s94, %s95
      %p109 = scmp.eq.s32.totalorder %s21, 1
      %p110 = por %p108, %p109
      %p112 = scmp.ne.s32.totalorder %s95, %s111
      %p113 = scmp.eq.s32.totalorder %s21, 0
      %p114 = por %p112, %p113
      %p115 = scmp.le.s32.totalorder 1, %s15
      %p116 = scmp.lt.s32.totalorder %s15, 3
      %p117 = pnand %p115, %p116
      %p118 = pneg %p117
      // Predicated region
      $region9: #{tpu_custom_call.1} parent=5 // pred_check
        _
      $region10: #{tpu_custom_call.1} parent=5 // pred_check_branch
        %120 = sbr.rel (%p117) target = $region12
      $region11: #{tpu_custom_call.1} parent=5 // pred_region
        %s121 = ssub.s32 %s15, 1
        // Predicated region
        $region13: #{tpu_custom_call.1} parent=11 // pred_check
          %p122 = pneg %p53
        $region14: #{tpu_custom_call.1} parent=11 // pred_check_branch
          %124 = sbr.rel (%p122) target = $region16
        $region15: #{tpu_custom_call.1} parent=11 // pred_region
          %s126 = ssub.s32 64, 64
          %127 = vsyncadd [#allocation3], %s126
          %s128 = smul.addr %s25, 64
          %s129 = scalar_lea.hbm %s0, %s128
          %s131 = sshll.u32 [#allocation2], 4
          %s132 = int_to_ptr.vmem [resolvable:$true] %s131
          %134 = dma.hbm_to_vmem [thread:$0]  %s129, 64, %s132, [#allocation3]
        $region16: #{tpu_custom_call.1} parent=11 // pred_fallthru
          _
      $region12: #{tpu_custom_call.1} parent=5 // pred_fallthru
        _
      %p135 = scmp.lt.s32.totalorder %s15, 2
      // Predicated region
      $region17: #{tpu_custom_call.1} parent=5 // pred_check
        %p136 = pneg %p135
      $region18: #{tpu_custom_call.1} parent=5 // pred_check_branch
        %138 = sbr.rel (%p136) target = $region20
      $region19: #{tpu_custom_call.1} parent=5 // pred_region
        // Predicated region
        $region21: #{tpu_custom_call.1} parent=19 // pred_check
          %p139 = pneg %p73
        $region22: #{tpu_custom_call.1} parent=19 // pred_check_branch
          %141 = sbr.rel (%p139) target = $region24
        $region23: #{tpu_custom_call.1} parent=19 // pred_region
          %s142 = sand.u32 %s63, 1
          %s143 = scalar_lea.sflag [#allocation6], %s142
          %s144 = sand.u32 %s63, 1
          %s145 = smul.addr %s144, 16
          %s146 = scalar_lea.vmem [#allocation5], %s145
          %s148 = ssub.s32 256, 256
          %149 = vsyncadd %s143, %s148
          %s150 = smul.addr %s22, 2
          %s151 = smul.addr %s150, 128
          %s152 = scalar_lea.hbm %s1, %s151
          %s153 = sshll.u32 %s146, 4
          %s154 = int_to_ptr.vmem [resolvable:$true] %s153
          %159 = dma.hbm_to_vmem [thread:$0]  %s152, 256, %s154, %s143, 128, 128, 8
        $region24: #{tpu_custom_call.1} parent=19 // pred_fallthru
          _
      $region20: #{tpu_custom_call.1} parent=5 // pred_fallthru
        _
      %p160 = scmp.le.s32.totalorder 1, %s15
      %p161 = scmp.lt.s32.totalorder %s15, 3
      %p162 = pnand %p160, %p161
      %p163 = pneg %p162
      // Predicated region
      $region25: #{tpu_custom_call.1} parent=5 // pred_check
        _
      $region26: #{tpu_custom_call.1} parent=5 // pred_check_branch
        %165 = sbr.rel (%p162) target = $region28
      $region27: #{tpu_custom_call.1} parent=5 // pred_region
        %s166 = ssub.s32 %s15, 1
        // Predicated region
        $region29: #{tpu_custom_call.1} parent=27 // pred_check
          %p167 = pneg %p53
        $region30: #{tpu_custom_call.1} parent=27 // pred_check_branch
          %169 = sbr.rel (%p167) target = $region32
        $region31: #{tpu_custom_call.1} parent=27 // pred_region
          %170 = dma.done [#allocation3], 64
        $region32: #{tpu_custom_call.1} parent=27 // pred_fallthru
          _
        %s171 = sand.u32 %s66, 1
        %s172 = scalar_lea.sflag [#allocation6], %s171
        %s173 = sand.u32 %s66, 1
        %s174 = smul.addr %s173, 16
        %s175 = scalar_lea.vmem [#allocation5], %s174
        // Predicated region
        $region33: #{tpu_custom_call.1} parent=27 // pred_check
          %p176 = pneg %p79
        $region34: #{tpu_custom_call.1} parent=27 // pred_check_branch
          %178 = sbr.rel (%p176) target = $region36
        $region35: #{tpu_custom_call.1} parent=27 // pred_region
          %179 = dma.done %s172, 256
        $region36: #{tpu_custom_call.1} parent=27 // pred_fallthru
          _
        %p180 = pneg %p53
        %p181 = pneg %p50
        %s182 = sand.u32 %s66, 1
        %s183 = scalar_lea.sflag [#allocation6], %s182
        %s184 = sand.u32 %s66, 1
        %s185 = smul.addr %s184, 16
        %s186 = scalar_lea.vmem [#allocation5], %s185
        %p187 = pneg %p79
        %p188 = pneg %p76
        %p189 = pneg %p107
        %p190 = pneg %p104
        %s191 = sand.u32 %s94, 1
        %s192 = scalar_lea.sflag [#allocation4], %s191
        %s193 = sand.u32 %s94, 1
        %s194 = smul.addr %s193, 4
        %s195 = scalar_lea.vmem [#allocation7], %s194
        %v196 = vld [vmem:[%s175] sm:$0xff]
        %v197 = vld [vmem:[%s175 + $0x8] sm:$0xff]
        %v198 = vlaneseq
        %v199 = vand.u32 %v198, 127
        %v200 = vld [vmem:[#allocation2] sm:$0xf]
        %201 = vset.pattern.permute.xlu0 0
        %202 = vperm.xlu0 %201, %v200
        %v203 = vpop.permute.xlu0 %202
        %vm204 = vcmp.eq.s32.totalorder %v199, %v203
        %v205 = vsel %vm204, 1, 0
        %v206 = vcvt.s32.f32 %v205
        %vm207 = vcmask 130048
        %v209 = vsel %vm207, %v206, 0
        %211 = vmatprep.subr.mxu0 0.0
        %212 = vmatpush1.msra.mxu0 %v196
        %213 = vmatprep.subr.mxu0 0.0
        %214 = vmatpush1.msra.mxu0 %v197
        %215 = vmatprep.subr.mxu0 0.0
        %216 = vmatpush1.msra.mxu0 0.0
        %217 = vmatprep.subr.mxu0 0.0
        %218 = vmatpush1.msra.mxu0 0.0
        %219 = vmatprep.subr.mxu0 0.0
        %220 = vmatpush1.msra.mxu0 0.0
        %221 = vmatprep.subr.mxu0 0.0
        %222 = vmatpush1.msra.mxu0 0.0
        %223 = vmatprep.subr.mxu0 0.0
        %224 = vmatpush1.msra.mxu0 0.0
        %225 = vmatprep.subr.mxu0 0.0
        %226 = vmatpush1.msra.mxu0 0.0
        %227 = vmatprep.subr.mxu0 0.0
        %228 = vmatpush1.msra.mxu0 0.0
        %229 = vmatprep.subr.mxu0 0.0
        %230 = vmatpush1.msra.mxu0 0.0
        %231 = vmatprep.subr.mxu0 0.0
        %232 = vmatpush1.msra.mxu0 0.0
        %233 = vmatprep.subr.mxu0 0.0
        %234 = vmatpush1.msra.mxu0 0.0
        %235 = vmatprep.subr.mxu0 0.0
        %236 = vmatpush1.msra.mxu0 0.0
        %237 = vmatprep.subr.mxu0 0.0
        %238 = vmatpush1.msra.mxu0 0.0
        %239 = vmatprep.subr.mxu0 0.0
        %240 = vmatpush1.msra.mxu0 0.0
        %241 = vmatprep.subr.mxu0 0.0
        %242 = vmatpush1.msra.mxu0 0.0
        %243 = vmatprep.subr.mxu0 0.0
        %244 = vmatpush1.msra.mxu0 0.0
        %245 = vmatprep.subr.mxu0 0.0
        %246 = vmatpush1.msra.mxu0 0.0
        %247 = vmatprep.subr.mxu0 0.0
        %248 = vmatpush1.msra.mxu0 0.0
        %249 = vmatprep.subr.mxu0 0.0
        %250 = vmatpush1.msra.mxu0 0.0
        %251 = vmatprep.subr.mxu0 0.0
        %252 = vmatpush1.msra.mxu0 0.0
        %253 = vmatprep.subr.mxu0 0.0
        %254 = vmatpush1.msra.mxu0 0.0
        %255 = vmatprep.subr.mxu0 0.0
        %256 = vmatpush1.msra.mxu0 0.0
        %257 = vmatprep.subr.mxu0 0.0
        %258 = vmatpush1.msra.mxu0 0.0
        %259 = vmatprep.subr.mxu0 0.0
        %260 = vmatpush1.msra.mxu0 0.0
        %261 = vmatprep.subr.mxu0 0.0
        %262 = vmatpush1.msra.mxu0 0.0
        %263 = vmatprep.subr.mxu0 0.0
        %264 = vmatpush1.msra.mxu0 0.0
        %265 = vmatprep.subr.mxu0 0.0
        %266 = vmatpush1.msra.mxu0 0.0
        %267 = vmatprep.subr.mxu0 0.0
        %268 = vmatpush1.msra.mxu0 0.0
        %269 = vmatprep.subr.mxu0 0.0
        %270 = vmatpush1.msra.mxu0 0.0
        %271 = vmatprep.subr.mxu0 0.0
        %272 = vmatpush1.msra.mxu0 0.0
        %273 = vmatprep.subr.mxu0 0.0
        %274 = vmatpush1.msra.mxu0 0.0
        %275 = vmatprep.mubr.f32.mxu0 0.0
        %276 = vmatmul.mubr.f32.gmra.mrb[0].mxu0 %v209
        %v277 = vpop.f32.mrb[0].mxu0
        %v278 = vadd.f32 0.0, %v277
        %v279 = vpop.f32.mrb[0].mxu0
        %280 = vdwg.mxu0
        %281 = vset.pattern.permute.xlu0 1
        %282 = vperm.xlu0 %281, %v200
        %v283 = vpop.permute.xlu0 %282
        %vm284 = vcmp.eq.s32.totalorder %v199, %v283
        %v285 = vsel %vm284, 1, 0
        %v286 = vcvt.s32.f32 %v285
        %v288 = vsel %vm207, %v286, 0
        %290 = vmatprep.subr.mxu0 0.0
        %291 = vmatpush1.msra.mxu0 %v196
        %292 = vmatprep.subr.mxu0 0.0
        %293 = vmatpush1.msra.mxu0 %v197
        %294 = vmatprep.subr.mxu0 0.0
        %295 = vmatpush1.msra.mxu0 0.0
        %296 = vmatprep.subr.mxu0 0.0
        %297 = vmatpush1.msra.mxu0 0.0
        %298 = vmatprep.subr.mxu0 0.0
        %299 = vmatpush1.msra.mxu0 0.0
        %300 = vmatprep.subr.mxu0 0.0
        %301 = vmatpush1.msra.mxu0 0.0
        %302 = vmatprep.subr.mxu0 0.0
        %303 = vmatpush1.msra.mxu0 0.0
        %304 = vmatprep.subr.mxu0 0.0
        %305 = vmatpush1.msra.mxu0 0.0
        %306 = vmatprep.subr.mxu0 0.0
        %307 = vmatpush1.msra.mxu0 0.0
        %308 = vmatprep.subr.mxu0 0.0
        %309 = vmatpush1.msra.mxu0 0.0
        %310 = vmatprep.subr.mxu0 0.0
        %311 = vmatpush1.msra.mxu0 0.0
        %312 = vmatprep.subr.mxu0 0.0
        %313 = vmatpush1.msra.mxu0 0.0
        %314 = vmatprep.subr.mxu0 0.0
        %315 = vmatpush1.msra.mxu0 0.0
        %316 = vmatprep.subr.mxu0 0.0
        %317 = vmatpush1.msra.mxu0 0.0
        %318 = vmatprep.subr.mxu0 0.0
        %319 = vmatpush1.msra.mxu0 0.0
        %320 = vmatprep.subr.mxu0 0.0
        %321 = vmatpush1.msra.mxu0 0.0
        %322 = vmatprep.subr.mxu0 0.0
        %323 = vmatpush1.msra.mxu0 0.0
        %324 = vmatprep.subr.mxu0 0.0
        %325 = vmatpush1.msra.mxu0 0.0
        %326 = vmatprep.subr.mxu0 0.0
        %327 = vmatpush1.msra.mxu0 0.0
        %328 = vmatprep.subr.mxu0 0.0
        %329 = vmatpush1.msra.mxu0 0.0
        %330 = vmatprep.subr.mxu0 0.0
        %331 = vmatpush1.msra.mxu0 0.0
        %332 = vmatprep.subr.mxu0 0.0
        %333 = vmatpush1.msra.mxu0 0.0
        %334 = vmatprep.subr.mxu0 0.0
        %335 = vmatpush1.msra.mxu0 0.0
        %336 = vmatprep.subr.mxu0 0.0
        %337 = vmatpush1.msra.mxu0 0.0
        %338 = vmatprep.subr.mxu0 0.0
        %339 = vmatpush1.msra.mxu0 0.0
        %340 = vmatprep.subr.mxu0 0.0
        %341 = vmatpush1.msra.mxu0 0.0
        %342 = vmatprep.subr.mxu0 0.0
        %343 = vmatpush1.msra.mxu0 0.0
        %344 = vmatprep.subr.mxu0 0.0
        %345 = vmatpush1.msra.mxu0 0.0
        %346 = vmatprep.subr.mxu0 0.0
        %347 = vmatpush1.msra.mxu0 0.0
        %348 = vmatprep.subr.mxu0 0.0
        %349 = vmatpush1.msra.mxu0 0.0
        %350 = vmatprep.subr.mxu0 0.0
        %351 = vmatpush1.msra.mxu0 0.0
        %352 = vmatprep.subr.mxu0 0.0
        %353 = vmatpush1.msra.mxu0 0.0
        %354 = vmatprep.mubr.f32.mxu0 0.0
        %355 = vmatmul.mubr.f32.gmra.mrb[0].mxu0 %v288
        %v356 = vpop.f32.mrb[0].mxu0
        %v357 = vadd.f32 0.0, %v356
        %v358 = vpop.f32.mrb[0].mxu0
        %359 = vdwg.mxu0
        %360 = vset.pattern.permute.xlu0 2
        %361 = vperm.xlu0 %360, %v200
        %v362 = vpop.permute.xlu0 %361
        %vm363 = vcmp.eq.s32.totalorder %v199, %v362
        %v364 = vsel %vm363, 1, 0
        %v365 = vcvt.s32.f32 %v364
        %v367 = vsel %vm207, %v365, 0
        %369 = vmatprep.subr.mxu0 0.0
        %370 = vmatpush1.msra.mxu0 %v196
        %371 = vmatprep.subr.mxu0 0.0
        %372 = vmatpush1.msra.mxu0 %v197
        %373 = vmatprep.subr.mxu0 0.0
        %374 = vmatpush1.msra.mxu0 0.0
        %375 = vmatprep.subr.mxu0 0.0
        %376 = vmatpush1.msra.mxu0 0.0
        %377 = vmatprep.subr.mxu0 0.0
        %378 = vmatpush1.msra.mxu0 0.0
        %379 = vmatprep.subr.mxu0 0.0
        %380 = vmatpush1.msra.mxu0 0.0
        %381 = vmatprep.subr.mxu0 0.0
        %382 = vmatpush1.msra.mxu0 0.0
        %383 = vmatprep.subr.mxu0 0.0
        %384 = vmatpush1.msra.mxu0 0.0
        %385 = vmatprep.subr.mxu0 0.0
        %386 = vmatpush1.msra.mxu0 0.0
        %387 = vmatprep.subr.mxu0 0.0
        %388 = vmatpush1.msra.mxu0 0.0
        %389 = vmatprep.subr.mxu0 0.0
        %390 = vmatpush1.msra.mxu0 0.0
        %391 = vmatprep.subr.mxu0 0.0
        %392 = vmatpush1.msra.mxu0 0.0
        %393 = vmatprep.subr.mxu0 0.0
        %394 = vmatpush1.msra.mxu0 0.0
        %395 = vmatprep.subr.mxu0 0.0
        %396 = vmatpush1.msra.mxu0 0.0
        %397 = vmatprep.subr.mxu0 0.0
        %398 = vmatpush1.msra.mxu0 0.0
        %399 = vmatprep.subr.mxu0 0.0
        %400 = vmatpush1.msra.mxu0 0.0
        %401 = vmatprep.subr.mxu0 0.0
        %402 = vmatpush1.msra.mxu0 0.0
        %403 = vmatprep.subr.mxu0 0.0
        %404 = vmatpush1.msra.mxu0 0.0
        %405 = vmatprep.subr.mxu0 0.0
        %406 = vmatpush1.msra.mxu0 0.0
        %407 = vmatprep.subr.mxu0 0.0
        %408 = vmatpush1.msra.mxu0 0.0
        %409 = vmatprep.subr.mxu0 0.0
        %410 = vmatpush1.msra.mxu0 0.0
        %411 = vmatprep.subr.mxu0 0.0
        %412 = vmatpush1.msra.mxu0 0.0
        %413 = vmatprep.subr.mxu0 0.0
        %414 = vmatpush1.msra.mxu0 0.0
        %415 = vmatprep.subr.mxu0 0.0
        %416 = vmatpush1.msra.mxu0 0.0
        %417 = vmatprep.subr.mxu0 0.0
        %418 = vmatpush1.msra.mxu0 0.0
        %419 = vmatprep.subr.mxu0 0.0
        %420 = vmatpush1.msra.mxu0 0.0
        %421 = vmatprep.subr.mxu0 0.0
        %422 = vmatpush1.msra.mxu0 0.0
        %423 = vmatprep.subr.mxu0 0.0
        %424 = vmatpush1.msra.mxu0 0.0
        %425 = vmatprep.subr.mxu0 0.0
        %426 = vmatpush1.msra.mxu0 0.0
        %427 = vmatprep.subr.mxu0 0.0
        %428 = vmatpush1.msra.mxu0 0.0
        %429 = vmatprep.subr.mxu0 0.0
        %430 = vmatpush1.msra.mxu0 0.0
        %431 = vmatprep.subr.mxu0 0.0
        %432 = vmatpush1.msra.mxu0 0.0
        %433 = vmatprep.mubr.f32.mxu0 0.0
        %434 = vmatmul.mubr.f32.gmra.mrb[0].mxu0 %v367
        %v435 = vpop.f32.mrb[0].mxu0
        %v436 = vadd.f32 0.0, %v435
        %v437 = vpop.f32.mrb[0].mxu0
        %438 = vdwg.mxu0
        %439 = vset.pattern.permute.xlu0 3
        %440 = vperm.xlu0 %439, %v200
        %v441 = vpop.permute.xlu0 %440
        %vm442 = vcmp.eq.s32.totalorder %v199, %v441
        %v443 = vsel %vm442, 1, 0
        %v444 = vcvt.s32.f32 %v443
        %v446 = vsel %vm207, %v444, 0
        %448 = vmatprep.subr.mxu0 0.0
        %449 = vmatpush1.msra.mxu0 %v196
        %450 = vmatprep.subr.mxu0 0.0
        %451 = vmatpush1.msra.mxu0 %v197
        %452 = vmatprep.subr.mxu0 0.0
        %453 = vmatpush1.msra.mxu0 0.0
        %454 = vmatprep.subr.mxu0 0.0
        %455 = vmatpush1.msra.mxu0 0.0
        %456 = vmatprep.subr.mxu0 0.0
        %457 = vmatpush1.msra.mxu0 0.0
        %458 = vmatprep.subr.mxu0 0.0
        %459 = vmatpush1.msra.mxu0 0.0
        %460 = vmatprep.subr.mxu0 0.0
        %461 = vmatpush1.msra.mxu0 0.0
        %462 = vmatprep.subr.mxu0 0.0
        %463 = vmatpush1.msra.mxu0 0.0
        %464 = vmatprep.subr.mxu0 0.0
        %465 = vmatpush1.msra.mxu0 0.0
        %466 = vmatprep.subr.mxu0 0.0
        %467 = vmatpush1.msra.mxu0 0.0
        %468 = vmatprep.subr.mxu0 0.0
        %469 = vmatpush1.msra.mxu0 0.0
        %470 = vmatprep.subr.mxu0 0.0
        %471 = vmatpush1.msra.mxu0 0.0
        %472 = vmatprep.subr.mxu0 0.0
        %473 = vmatpush1.msra.mxu0 0.0
        %474 = vmatprep.subr.mxu0 0.0
        %475 = vmatpush1.msra.mxu0 0.0
        %476 = vmatprep.subr.mxu0 0.0
        %477 = vmatpush1.msra.mxu0 0.0
        %478 = vmatprep.subr.mxu0 0.0
        %479 = vmatpush1.msra.mxu0 0.0
        %480 = vmatprep.subr.mxu0 0.0
        %481 = vmatpush1.msra.mxu0 0.0
        %482 = vmatprep.subr.mxu0 0.0
        %483 = vmatpush1.msra.mxu0 0.0
        %484 = vmatprep.subr.mxu0 0.0
        %485 = vmatpush1.msra.mxu0 0.0
        %486 = vmatprep.subr.mxu0 0.0
        %487 = vmatpush1.msra.mxu0 0.0
        %488 = vmatprep.subr.mxu0 0.0
        %489 = vmatpush1.msra.mxu0 0.0
        %490 = vmatprep.subr.mxu0 0.0
        %491 = vmatpush1.msra.mxu0 0.0
        %492 = vmatprep.subr.mxu0 0.0
        %493 = vmatpush1.msra.mxu0 0.0
        %494 = vmatprep.subr.mxu0 0.0
        %495 = vmatpush1.msra.mxu0 0.0
        %496 = vmatprep.subr.mxu0 0.0
        %497 = vmatpush1.msra.mxu0 0.0
        %498 = vmatprep.subr.mxu0 0.0
        %499 = vmatpush1.msra.mxu0 0.0
        %500 = vmatprep.subr.mxu0 0.0
        %501 = vmatpush1.msra.mxu0 0.0
        %502 = vmatprep.subr.mxu0 0.0
        %503 = vmatpush1.msra.mxu0 0.0
        %504 = vmatprep.subr.mxu0 0.0
        %505 = vmatpush1.msra.mxu0 0.0
        %506 = vmatprep.subr.mxu0 0.0
        %507 = vmatpush1.msra.mxu0 0.0
        %508 = vmatprep.subr.mxu0 0.0
        %509 = vmatpush1.msra.mxu0 0.0
        %510 = vmatprep.subr.mxu0 0.0
        %511 = vmatpush1.msra.mxu0 0.0
        %512 = vmatprep.mubr.f32.mxu0 0.0
        %513 = vmatmul.mubr.f32.gmra.mrb[0].mxu0 %v446
        %v514 = vpop.f32.mrb[0].mxu0
        %v515 = vadd.f32 0.0, %v514
        %v516 = vpop.f32.mrb[0].mxu0
        %517 = vdwg.mxu0
        %519 = vrot.lane.b32.xlu0 %v357, 32
        %v520 = vpop.permute.xlu0 %519
        %523 = vrot.lane.b32.xlu0 %v436, 64
        %v524 = vpop.permute.xlu0 %523
        %527 = vrot.lane.b32.xlu0 %v515, 96
        %v528 = vpop.permute.xlu0 %527
        %vm530 = vcmask 261120
        %v531 = vsel %vm530, %v278, %v520
        %vm532 = vcmask 523264
        %v533 = vsel %vm532, %v531, %v524
        %vm534 = vcmask 785408
        %v535 = vsel %vm534, %v533, %v528
        %536 = vst [vmem:[%s195] sm:$0xf] %v535
        %s537 = sand.u32 %s94, 1
        %s538 = scalar_lea.sflag [#allocation4], %s537
        %s539 = sand.u32 %s94, 1
        %s540 = smul.addr %s539, 4
        %s541 = scalar_lea.vmem [#allocation7], %s540
        // Predicated region
        $region37: #{tpu_custom_call.1} parent=27 // pred_check
          %p542 = pneg %p104
        $region38: #{tpu_custom_call.1} parent=27 // pred_check_branch
          %544 = sbr.rel (%p542) target = $region40
        $region39: #{tpu_custom_call.1} parent=27 // pred_region
          %s546 = ssub.s32 64, 64
          %547 = vsyncadd %s538, %s546
          %s548 = sadd.s32 %s25, %s24
          %s549 = smul.addr %s548, 64
          %s550 = scalar_lea.hbm %s2, %s549
          %s552 = sshll.u32 %s541, 4
          %s553 = int_to_ptr.vmem [resolvable:$true] %s552
          %555 = dma.vmem_to_hbm [thread:$0]  %s553, 64, %s550, %s538
        $region40: #{tpu_custom_call.1} parent=27 // pred_fallthru
          _
      $region28: #{tpu_custom_call.1} parent=5 // pred_fallthru
        _
      %p556 = scmp.le.s32.totalorder 2, %s15
      // Predicated region
      $region41: #{tpu_custom_call.1} parent=5 // pred_check
        %p557 = pneg %p556
      $region42: #{tpu_custom_call.1} parent=5 // pred_check_branch
        %559 = sbr.rel (%p557) target = $region44
      $region43: #{tpu_custom_call.1} parent=5 // pred_region
        %s560 = ssub.s32 %s15, 2
        // Predicated region
        $region45: #{tpu_custom_call.1} parent=43 // pred_check
          %p561 = pneg %p110
        $region46: #{tpu_custom_call.1} parent=43 // pred_check_branch
          %563 = sbr.rel (%p561) target = $region48
        $region47: #{tpu_custom_call.1} parent=43 // pred_region
          %s564 = sand.u32 %s95, 1
          %s565 = scalar_lea.sflag [#allocation4], %s564
          %s566 = sand.u32 %s95, 1
          %s567 = smul.addr %s566, 4
          %s568 = scalar_lea.vmem [#allocation7], %s567
          %569 = dma.done %s565, 64
        $region48: #{tpu_custom_call.1} parent=43 // pred_fallthru
          _
      $region44: #{tpu_custom_call.1} parent=5 // pred_fallthru
        _
    $region6: #{tpu_custom_call.1} parent=1 // loop_footer
      %s19 = sadd.s32 1, %s15
    $region7: #{tpu_custom_call.1} parent=1 // loop_footer_branch
      %14 = sbr.rel target = $region3
    $region8: #{tpu_custom_call.1} parent=1 // loop_exit
      _
    %570 = vsyncpa [#allocation3], 1
    %s571 = scalar_lea.sflag [#allocation3], 1
    %572 = vsyncpa %s571, 1
    %573 = vsyncpa [#allocation6], 1
    %s574 = scalar_lea.sflag [#allocation6], 1
    %575 = vsyncpa %s574, 1
    %576 = vsyncpa [#allocation4], 1
    %s577 = scalar_lea.sflag [#allocation4], 1
    %578 = vsyncpa %s577, 1

</llo_original>
